<compile_context>
chip_gen: v7x
topology: tpu7x:2x2x1
jax: 0.10.0
libtpu: 0.0.40
codegen_flags: <defaults>
</compile_context>

<pallas_src>
import functools

import jax
import jax.numpy as jnp
from jax.experimental import pallas as pl
from jax.experimental.pallas import tpu as pltpu

H = 128  # lane-dense padded width for all hidden layers


def _round_up(x, m):
    return ((x + m - 1) // m) * m


def _leaky_relu(v):
    return jnp.where(v > 0, v, 0.2 * v)


# --------------------------------------------------------------------------
# Kernel
# --------------------------------------------------------------------------
def generator_mlp_kernel(z_ref, lbl_ref,
                         w1z_ref, t_ref,
                         w2_ref, b2_ref,
                         w3_ref, b3_ref,
                         w4_ref, b4_ref,
                         out_ref):
    mxu = w2_ref.dtype                       # bf16 (default) or f32
    tb = z_ref.shape[0]
    nl = t_ref.shape[0]

    z = z_ref[...].astype(mxu)               # (TB, z_size)
    lbl = lbl_ref[...]                       # (TB, 1) int32
    onehot = (jax.lax.broadcasted_iota(jnp.int32, (tb, nl), 1)
              == lbl).astype(mxu)            # (TB, num_labels)

    # Layer 1 (fused embedding gather + concat):
    #   h1 = z @ W1[:z] + onehot @ (emb @ W1[z:] + b1)
    h = jnp.dot(z, w1z_ref[...], preferred_element_type=jnp.float32)
    h = h + jnp.dot(onehot, t_ref[...], preferred_element_type=jnp.float32)
    h = _leaky_relu(h)
    # Layer 2
    h = jnp.dot(h.astype(mxu), w2_ref[...],
                preferred_element_type=jnp.float32) + b2_ref[...]
    h = _leaky_relu(h)
    # Layer 3
    h = jnp.dot(h.astype(mxu), w3_ref[...],
                preferred_element_type=jnp.float32) + b3_ref[...]
    h = _leaky_relu(h)
    # Layer 4 + Tanh, stored transposed (num_dims_pad, TB): lane-dense along TB.
    h = jnp.dot(h.astype(mxu), w4_ref[...],
                preferred_element_type=jnp.float32) + b4_ref[...]
    out_ref[...] = jnp.tanh(h).T[:out_ref.shape[0], :]


# --------------------------------------------------------------------------
# One-time parameter preparation (hoisted out of the per-call path)
# --------------------------------------------------------------------------
def prepare_params(params, num_labels, z_size, num_dims, use_bf16=True):
    """Pad all feature dims to 128 lanes, fuse emb/b1 into a per-label table."""
    assert num_dims <= H  # TODO(synk): tile layer-4 output if num_dims > 128
    mxu_dtype = jnp.bfloat16 if use_bf16 else jnp.float32
    f32 = jnp.float32
    in_dim = z_size + num_labels

    w1p = jnp.zeros((in_dim, H), f32).at[:, :32].set(params["w1"].astype(f32))
    b1p = jnp.zeros((1, H), f32).at[:, :32].set(params["b1"].astype(f32))
    w2p = jnp.zeros((H, H), f32).at[:32, :64].set(params["w2"].astype(f32))
    b2p = jnp.zeros((1, H), f32).at[:, :64].set(params["b2"].astype(f32))
    w3p = jnp.zeros((H, H), f32).at[:64, :128].set(params["w3"].astype(f32))
    b3p = jnp.zeros((1, H), f32).at[:, :128].set(params["b3"].astype(f32))
    w4p = jnp.zeros((H, H), f32).at[:, :num_dims].set(params["w4"].astype(f32))
    b4p = jnp.zeros((1, H), f32).at[:, :num_dims].set(params["b4"].astype(f32))

    w1z = w1p[:z_size]                       # (z_size, H): acts on z directly
    if num_labels != 0:
        # (num_labels, H): per-label contribution of the embedded class vector
        # through layer 1, bias folded in.  Exact-precision precompute.
        t_table = jnp.dot(params["emb"].astype(f32), w1p[z_size:],
                          precision=jax.lax.Precision.HIGHEST) + b1p
    else:
        t_table = b1p                        # (1, H): onehot of all-ones adds b1

    return dict(
        w1z=w1z.astype(mxu_dtype),
        t_table=t_table.astype(mxu_dtype),
        w2=w2p.astype(mxu_dtype), b2=b2p,
        w3=w3p.astype(mxu_dtype), b3=b3p,
        w4=w4p.astype(mxu_dtype), b4=b4p,
    )


def _choose_tile(batch, tile_batch):
    """Batch tile: multiple of 8; multiple of 128 (lane-dense transposed
    output) when the grid has >1 step; capped so large batches give >=2 grid
    steps (keeps both v7x TensorCores busy)."""
    bp8 = _round_up(max(batch, 1), 8)
    tile_batch = max(128, (tile_batch // 128) * 128)
    if bp8 <= tile_batch:
        return bp8, bp8                      # single step, block == full array
    half = _round_up(-(-bp8 // 2), 128)
    tb = min(tile_batch, half)
    bp = _round_up(batch, tb)
    return tb, bp


# --------------------------------------------------------------------------
# Forward wrapper
# --------------------------------------------------------------------------
@functools.partial(jax.jit,
                   static_argnames=("num_labels", "z_size", "num_dims",
                                    "tile_batch"))
def generator_forward(z, labels, prepped, *, num_labels, z_size, num_dims,
                      tile_batch=1024):
    """Pallas-backed forward pass of Generator (MNIST=False)."""
    B = z.shape[0]
    z = z.reshape(B, z_size).astype(jnp.float32)   # z.view(z.size(0), z_size)

    if num_labels != 0:
        lbl = labels.reshape(B, 1).astype(jnp.int32)
    else:
        lbl = jnp.zeros((B, 1), jnp.int32)

    TB, Bp = _choose_tile(B, tile_batch)
    if Bp != B:
        z = jnp.pad(z, ((0, Bp - B), (0, 0)))
        lbl = jnp.pad(lbl, ((0, Bp - B), (0, 0)))

    nd_pad = _round_up(num_dims, 8)
    nl_eff = prepped["t_table"].shape[0]
    grid = (Bp // TB,)

    row = lambda feat: pl.BlockSpec((TB, feat), lambda i: (i, 0))      # tiled
    res = lambda shape: pl.BlockSpec(shape, lambda i: (0, 0))          # resident

    w_bytes = ((z_size * H + nl_eff * H + 3 * H * H)
               * jnp.dtype(prepped["w2"].dtype).itemsize + 3 * 4 * H)
    cost = pl.CostEstimate(
        flops=2 * Bp * (z_size + nl_eff + 3 * H) * H,
        transcendentals=Bp * H,
        bytes_accessed=4 * Bp * (z_size + 1 + nd_pad) + w_bytes,
    )

    out_t = pl.pallas_call(
        generator_mlp_kernel,
        out_shape=jax.ShapeDtypeStruct((nd_pad, Bp), jnp.float32),
        grid_spec=pltpu.PrefetchScalarGridSpec(
            num_scalar_prefetch=0,
            grid=grid,
            in_specs=[
                row(z_size),                 # z tile
                row(1),                      # label tile (i32)
                res((z_size, H)),            # W1 (z part)
                res((nl_eff, H)),            # fused per-label table (emb@W1c+b1)
                res((H, H)), res((1, H)),    # W2, b2
                res((H, H)), res((1, H)),    # W3, b3
                res((H, H)), res((1, H)),    # W4, b4
            ],
            out_specs=pl.BlockSpec((nd_pad, TB), lambda i: (0, i)),
        ),
        compiler_params=pltpu.CompilerParams(
            dimension_semantics=("parallel",),
        ),
        cost_estimate=cost,
    )(z, lbl,
      prepped["w1z"], prepped["t_table"],
      prepped["w2"], prepped["b2"],
      prepped["w3"], prepped["b3"],
      prepped["w4"], prepped["b4"])

    # Small (nd_pad, Bp) buffer -> (B, num_dims).
    return out_t[:num_dims, :B].T


# --------------------------------------------------------------------------
# Reference & test
# --------------------------------------------------------------------------
def init_params(key, num_labels, z_size, num_dims):
    """Deterministic synthetic params (shapes mirror nn.Module __init__)."""
    in_dim = z_size + num_labels
    dims = [(in_dim, 32), (32, 64), (64, 128), (128, num_dims)]
    keys = jax.random.split(key, 2 * len(dims) + 1)
    params = {}
    if num_labels != 0:
        params["emb"] = jax.random.normal(keys[0], (num_labels, num_labels),
                                          dtype=jnp.float32)
    for i, (din, dout) in enumerate(dims, start=1):
        scale = 1.0 / jnp.sqrt(jnp.float32(din))
        params[f"w{i}"] = scale * jax.random.normal(
            keys[2 * i - 1], (din, dout), dtype=jnp.float32)
        params[f"b{i}"] = scale * jax.random.normal(
            keys[2 * i], (1, dout), dtype=jnp.float32)
    return params


def reference_forward(z, labels, params, num_labels, z_size, num_dims):
    """Pure-JAX f32 reference (unpadded math, highest matmul precision)."""
    hi = jax.lax.Precision.HIGHEST
    B = z.shape[0]
    z = z.reshape(B, z_size)
    if num_labels != 0:
        c = jnp.take(params["emb"], labels, axis=0)
        x = jnp.concatenate([z, c], axis=1)
    else:
        x = z
    h = _leaky_relu(jnp.dot(x, params["w1"], precision=hi) + params["b1"])
    h = _leaky_relu(jnp.dot(h, params["w2"], precision=hi) + params["b2"])
    h = _leaky_relu(jnp.dot(h, params["w3"], precision=hi) + params["b3"])
    return jnp.tanh(jnp.dot(h, params["w4"], precision=hi) + params["b4"])


if __name__ == "__main__":
    num_labels = 4
    z_size = 8
    num_dims = 20
    batch = 2

    key = jax.random.PRNGKey(0)
    k_param, k_z, k_lab = jax.random.split(key, 3)

    params = init_params(k_param, num_labels, z_size, num_dims)
    z = jax.random.normal(k_z, (batch, z_size), dtype=jnp.float32)
    labels = jax.random.randint(k_lab, (batch,), 0, num_labels, dtype=jnp.int32)

    ref = reference_forward(z, labels, params, num_labels, z_size, num_dims)

    # Exact f32-operand path.
    pp32 = prepare_params(params, num_labels, z_size, num_dims, use_bf16=False)
    out32 = jax.block_until_ready(
        generator_forward(z, labels, pp32, num_labels=num_labels,
                          z_size=z_size, num_dims=num_dims))
    assert out32.shape == (batch, num_dims)
    assert jnp.allclose(out32, ref, atol=1e-4, rtol=1e-4), (
        float(jnp.max(jnp.abs(out32 - ref))))

    # bf16-MXU-operand path (recommended on v6e/v7x; f32 accumulate + f32 VPU).
    ppbf = prepare_params(params, num_labels, z_size, num_dims, use_bf16=True)
    outbf = jax.block_until_ready(
        generator_forward(z, labels, ppbf, num_labels=num_labels,
                          z_size=z_size, num_dims=num_dims))
    assert outbf.shape == (batch, num_dims)
    assert jnp.allclose(outbf, ref, atol=3e-2, rtol=3e-2), (
        float(jnp.max(jnp.abs(outbf - ref))))

    print("KERNEL_OK")
</pallas_src>

<mosaic_0001>
module attributes {stable_mosaic.version = 11 : i64} {
  func.func @generator_mlp_kernel(%arg0: i32, %arg1: memref<8x8xf32, #tpu.memory_space<vmem>>, %arg2: memref<8x1xi32, #tpu.memory_space<vmem>>, %arg3: memref<8x128xf32, #tpu.memory_space<vmem>>, %arg4: memref<4x128xf32, #tpu.memory_space<vmem>>, %arg5: memref<128x128xf32, #tpu.memory_space<vmem>>, %arg6: memref<1x128xf32, #tpu.memory_space<vmem>>, %arg7: memref<128x128xf32, #tpu.memory_space<vmem>>, %arg8: memref<1x128xf32, #tpu.memory_space<vmem>>, %arg9: memref<128x128xf32, #tpu.memory_space<vmem>>, %arg10: memref<1x128xf32, #tpu.memory_space<vmem>>, %arg11: memref<24x8xf32, #tpu.memory_space<vmem>>) attributes {dimension_semantics = [#tpu.dimension_semantics<parallel>], iteration_bounds = array<i64: 1>, scalar_prefetch = 0 : i64, scratch_operands = 0 : i64, tpu.core_type = #tpu.core_type<tc>, window_params = [{transform_indices = @transform_0, window_bounds = array<i64: 8, 8>}, {transform_indices = @transform_1, window_bounds = array<i64: 8, 1>}, {pipeline_mode = #tpu.pipeline_mode<synchronous>, transform_indices = @transform_2, window_bounds = array<i64: 8, 128>}, {pipeline_mode = #tpu.pipeline_mode<synchronous>, transform_indices = @transform_3, window_bounds = array<i64: 4, 128>}, {pipeline_mode = #tpu.pipeline_mode<synchronous>, transform_indices = @transform_4, window_bounds = array<i64: 128, 128>}, {pipeline_mode = #tpu.pipeline_mode<synchronous>, transform_indices = @transform_5, window_bounds = array<i64: 1, 128>}, {pipeline_mode = #tpu.pipeline_mode<synchronous>, transform_indices = @transform_6, window_bounds = array<i64: 128, 128>}, {pipeline_mode = #tpu.pipeline_mode<synchronous>, transform_indices = @transform_7, window_bounds = array<i64: 1, 128>}, {pipeline_mode = #tpu.pipeline_mode<synchronous>, transform_indices = @transform_8, window_bounds = array<i64: 128, 128>}, {pipeline_mode = #tpu.pipeline_mode<synchronous>, transform_indices = @transform_9, window_bounds = array<i64: 1, 128>}, {transform_indices = @transform_10, window_bounds = array<i64: 24, 8>}]} {
    %c0 = arith.constant 0 : index
    %c0_0 = arith.constant 0 : index
    %0 = vector.load %arg1[%c0, %c0_0] : memref<8x8xf32, #tpu.memory_space<vmem>>, vector<8x8xf32>
    %c0_1 = arith.constant 0 : index
    %c0_2 = arith.constant 0 : index
    %1 = vector.load %arg2[%c0_1, %c0_2] : memref<8x1xi32, #tpu.memory_space<vmem>>, vector<8x1xi32>
    %2 = tpu.iota {dimensions = array<i32: 1>} : vector<8x4xi32>
    %3 = vector.broadcast %1 : vector<8x1xi32> to vector<8x4xi32>
    %4 = arith.cmpi eq, %2, %3 : vector<8x4xi32>
    %5 = arith.extui %4 : vector<8x4xi1> to vector<8x4xi32>
    %6 = arith.sitofp %5 : vector<8x4xi32> to vector<8x4xf32>
    %c0_3 = arith.constant 0 : index
    %c0_4 = arith.constant 0 : index
    %7 = vector.load %arg3[%c0_3, %c0_4] : memref<8x128xf32, #tpu.memory_space<vmem>>, vector<8x128xf32>
    %cst = arith.constant dense<0.000000e+00> : vector<8x128xf32>
    %8 = tpu.matmul %0, %7, %cst {dimension_numbers = #tpu.dot_dimension_numbers<[1], [0], [0], [1], [0, 0, 1, 1], [], []>} : vector<8x8xf32>, vector<8x128xf32>, vector<8x128xf32> -> vector<8x128xf32>
    %c0_5 = arith.constant 0 : index
    %c0_6 = arith.constant 0 : index
    %9 = vector.load %arg4[%c0_5, %c0_6] : memref<4x128xf32, #tpu.memory_space<vmem>>, vector<4x128xf32>
    %cst_7 = arith.constant dense<0.000000e+00> : vector<8x128xf32>
    %10 = tpu.matmul %6, %9, %cst_7 {dimension_numbers = #tpu.dot_dimension_numbers<[1], [0], [0], [1], [0, 0, 1, 1], [], []>} : vector<8x4xf32>, vector<4x128xf32>, vector<8x128xf32> -> vector<8x128xf32>
    %11 = arith.addf %8, %10 : vector<8x128xf32>
    %cst_8 = arith.constant 0.000000e+00 : f32
    %12 = vector.broadcast %cst_8 : f32 to vector<8x128xf32>
    %13 = arith.cmpf ogt, %11, %12 : vector<8x128xf32>
    %cst_9 = arith.constant 2.000000e-01 : f32
    %14 = vector.broadcast %cst_9 : f32 to vector<8x128xf32>
    %15 = arith.mulf %14, %11 : vector<8x128xf32>
    %16 = arith.select %13, %11, %15 : vector<8x128xi1>, vector<8x128xf32>
    %c0_10 = arith.constant 0 : index
    %c0_11 = arith.constant 0 : index
    %17 = vector.load %arg5[%c0_10, %c0_11] : memref<128x128xf32, #tpu.memory_space<vmem>>, vector<128x128xf32>
    %cst_12 = arith.constant dense<0.000000e+00> : vector<8x128xf32>
    %18 = tpu.matmul %16, %17, %cst_12 {dimension_numbers = #tpu.dot_dimension_numbers<[1], [0], [0], [1], [0, 0, 1, 1], [], []>} : vector<8x128xf32>, vector<128x128xf32>, vector<8x128xf32> -> vector<8x128xf32>
    %c0_13 = arith.constant 0 : index
    %c0_14 = arith.constant 0 : index
    %19 = vector.load %arg6[%c0_13, %c0_14] : memref<1x128xf32, #tpu.memory_space<vmem>>, vector<1x128xf32>
    %20 = vector.broadcast %19 : vector<1x128xf32> to vector<8x128xf32>
    %21 = arith.addf %18, %20 : vector<8x128xf32>
    %cst_15 = arith.constant 0.000000e+00 : f32
    %22 = vector.broadcast %cst_15 : f32 to vector<8x128xf32>
    %23 = arith.cmpf ogt, %21, %22 : vector<8x128xf32>
    %cst_16 = arith.constant 2.000000e-01 : f32
    %24 = vector.broadcast %cst_16 : f32 to vector<8x128xf32>
    %25 = arith.mulf %24, %21 : vector<8x128xf32>
    %26 = arith.select %23, %21, %25 : vector<8x128xi1>, vector<8x128xf32>
    %c0_17 = arith.constant 0 : index
    %c0_18 = arith.constant 0 : index
    %27 = vector.load %arg7[%c0_17, %c0_18] : memref<128x128xf32, #tpu.memory_space<vmem>>, vector<128x128xf32>
    %cst_19 = arith.constant dense<0.000000e+00> : vector<8x128xf32>
    %28 = tpu.matmul %26, %27, %cst_19 {dimension_numbers = #tpu.dot_dimension_numbers<[1], [0], [0], [1], [0, 0, 1, 1], [], []>} : vector<8x128xf32>, vector<128x128xf32>, vector<8x128xf32> -> vector<8x128xf32>
    %c0_20 = arith.constant 0 : index
    %c0_21 = arith.constant 0 : index
    %29 = vector.load %arg8[%c0_20, %c0_21] : memref<1x128xf32, #tpu.memory_space<vmem>>, vector<1x128xf32>
    %30 = vector.broadcast %29 : vector<1x128xf32> to vector<8x128xf32>
    %31 = arith.addf %28, %30 : vector<8x128xf32>
    %cst_22 = arith.constant 0.000000e+00 : f32
    %32 = vector.broadcast %cst_22 : f32 to vector<8x128xf32>
    %33 = arith.cmpf ogt, %31, %32 : vector<8x128xf32>
    %cst_23 = arith.constant 2.000000e-01 : f32
    %34 = vector.broadcast %cst_23 : f32 to vector<8x128xf32>
    %35 = arith.mulf %34, %31 : vector<8x128xf32>
    %36 = arith.select %33, %31, %35 : vector<8x128xi1>, vector<8x128xf32>
    %c0_24 = arith.constant 0 : index
    %c0_25 = arith.constant 0 : index
    %37 = vector.load %arg9[%c0_24, %c0_25] : memref<128x128xf32, #tpu.memory_space<vmem>>, vector<128x128xf32>
    %cst_26 = arith.constant dense<0.000000e+00> : vector<8x128xf32>
    %38 = tpu.matmul %36, %37, %cst_26 {dimension_numbers = #tpu.dot_dimension_numbers<[1], [0], [0], [1], [0, 0, 1, 1], [], []>} : vector<8x128xf32>, vector<128x128xf32>, vector<8x128xf32> -> vector<8x128xf32>
    %c0_27 = arith.constant 0 : index
    %c0_28 = arith.constant 0 : index
    %39 = vector.load %arg10[%c0_27, %c0_28] : memref<1x128xf32, #tpu.memory_space<vmem>>, vector<1x128xf32>
    %40 = vector.broadcast %39 : vector<1x128xf32> to vector<8x128xf32>
    %41 = arith.addf %38, %40 : vector<8x128xf32>
    %42 = math.tanh %41 : vector<8x128xf32>
    %43 = tpu.transpose %42, [1, 0] : vector<8x128xf32> -> vector<128x8xf32>
    %44 = vector.extract_strided_slice %43 {offsets = [0, 0], sizes = [24, 8], strides = [1, 1]} : vector<128x8xf32> to vector<24x8xf32>
    %c0_29 = arith.constant 0 : index
    %c0_30 = arith.constant 0 : index
    %45 = vector.load %arg11[%c0_29, %c0_30] : memref<24x8xf32, #tpu.memory_space<vmem>>, vector<24x8xf32>
    tpu.vector_store %arg11[%c0_29, %c0_30], %44 {strides = array<i32>} : memref<24x8xf32, #tpu.memory_space<vmem>>, vector<24x8xf32>,
    return
  }
  func.func @transform_0(%arg0: i32) -> (i32, i32) {
    %c0_i32 = arith.constant 0 : i32
    %c0_i32_0 = arith.constant 0 : i32
    return %arg0, %c0_i32 : i32, i32
  }
  func.func @transform_1(%arg0: i32) -> (i32, i32) {
    %c0_i32 = arith.constant 0 : i32
    %c0_i32_0 = arith.constant 0 : i32
    return %arg0, %c0_i32 : i32, i32
  }
  func.func @transform_2(%arg0: i32) -> (i32, i32) {
    %c0_i32 = arith.constant 0 : i32
    %c0_i32_0 = arith.constant 0 : i32
    %c0_i32_1 = arith.constant 0 : i32
    return %c0_i32, %c0_i32_0 : i32, i32
  }
  func.func @transform_3(%arg0: i32) -> (i32, i32) {
    %c0_i32 = arith.constant 0 : i32
    %c0_i32_0 = arith.constant 0 : i32
    %c0_i32_1 = arith.constant 0 : i32
    return %c0_i32, %c0_i32_0 : i32, i32
  }
  func.func @transform_4(%arg0: i32) -> (i32, i32) {
    %c0_i32 = arith.constant 0 : i32
    %c0_i32_0 = arith.constant 0 : i32
    %c0_i32_1 = arith.constant 0 : i32
    return %c0_i32, %c0_i32_0 : i32, i32
  }
  func.func @transform_5(%arg0: i32) -> (i32, i32) {
    %c0_i32 = arith.constant 0 : i32
    %c0_i32_0 = arith.constant 0 : i32
    %c0_i32_1 = arith.constant 0 : i32
    return %c0_i32, %c0_i32_0 : i32, i32
  }
  func.func @transform_6(%arg0: i32) -> (i32, i32) {
    %c0_i32 = arith.constant 0 : i32
    %c0_i32_0 = arith.constant 0 : i32
    %c0_i32_1 = arith.constant 0 : i32
    return %c0_i32, %c0_i32_0 : i32, i32
  }
  func.func @transform_7(%arg0: i32) -> (i32, i32) {
    %c0_i32 = arith.constant 0 : i32
    %c0_i32_0 = arith.constant 0 : i32
    %c0_i32_1 = arith.constant 0 : i32
    return %c0_i32, %c0_i32_0 : i32, i32
  }
  func.func @transform_8(%arg0: i32) -> (i32, i32) {
    %c0_i32 = arith.constant 0 : i32
    %c0_i32_0 = arith.constant 0 : i32
    %c0_i32_1 = arith.constant 0 : i32
    return %c0_i32, %c0_i32_0 : i32, i32
  }
  func.func @transform_9(%arg0: i32) -> (i32, i32) {
    %c0_i32 = arith.constant 0 : i32
    %c0_i32_0 = arith.constant 0 : i32
    %c0_i32_1 = arith.constant 0 : i32
    return %c0_i32, %c0_i32_0 : i32, i32
  }
  func.func @transform_10(%arg0: i32) -> (i32, i32) {
    %c0_i32 = arith.constant 0 : i32
    %c0_i32_0 = arith.constant 0 : i32
    return %c0_i32, %arg0 : i32, i32
  }
}

</mosaic_0001>

<llo_original>
// kernel: generator_forward.1
$region0: #{generator_forward.1}
  #allocation0 [shape = 'u32[]', space=smem, size = 0x4, offset = 0x4, fixed_abs, tag = 'smem constant byte address 0x4 - core index']
  #allocation1 [shape = 'u32[144,128]{1,0:T(1,128)}', space=vmem, size = 0x12000, scoped, tag = 'internal scratch']
  %s0 = inlined_call_operand.vmem [shape: f32[8,8], index: 0, kind: input, shape index: {}]
  %s1 = inlined_call_operand.vmem [shape: s32[8,1], index: 1, kind: input, shape index: {}]
  %s2 = inlined_call_operand.vmem [shape: f32[8,128], index: 2, kind: input, shape index: {}]
  %s3 = inlined_call_operand.vmem [shape: f32[4,128], index: 3, kind: input, shape index: {}]
  %s4 = inlined_call_operand.hbm [shape: f32[128,128], index: 4, kind: input, shape index: {}]
  %s5 = inlined_call_operand.vmem [shape: f32[1,128], index: 5, kind: input, shape index: {}]
  %s6 = inlined_call_operand.hbm [shape: f32[128,128], index: 6, kind: input, shape index: {}]
  %s7 = inlined_call_operand.vmem [shape: f32[1,128], index: 7, kind: input, shape index: {}]
  %s8 = inlined_call_operand.hbm [shape: f32[128,128], index: 8, kind: input, shape index: {}]
  %s9 = inlined_call_operand.vmem [shape: f32[1,128], index: 9, kind: input, shape index: {}]
  %s10 = inlined_call_operand.vmem [shape: f32[24,8], index: 10, kind: output, shape index: {}]
  %s11 = sld [smem:[#allocation0]]
  $region62: #{generator_forward.1} parent=0
    _
  %s13 = ssub.s32 1, %s11
  %s14 = scalar_select 0, %s13, %s11
  $region1: #{generator_forward.1} parent=0
    #allocation2 [shape = 'u8[65536]{0}', space=vmem, size = 0x10000, scoped, tag = 'input window, operand 4, single buffered']
    #allocation3 [shape = 's32[1]{0}', space=sflag, size = 0x4, scoped, tag = 'scoped memory for generator_forward.1']
    #allocation4 [shape = 'u8[65536]{0}', space=vmem, size = 0x10000, scoped, tag = 'input window, operand 6, single buffered']
    #allocation5 [shape = 's32[1]{0}', space=sflag, size = 0x4, scoped, tag = 'scoped memory for generator_forward.1']
    #allocation6 [shape = 'u8[65536]{0}', space=vmem, size = 0x10000, scoped, tag = 'input window, operand 8, single buffered']
    %15 = vsyncpa [#allocation3], 0
    %16 = vsyncpa [#allocation5], 0
    // Predicated region
    $region2: #{generator_forward.1} parent=1 // pred_check
      _
    $region3: #{generator_forward.1} parent=1 // pred_check_branch
      %18 = sbr.rel (0) target = $region5
    $region4: #{generator_forward.1} parent=1 // pred_region
      _
    $region5: #{generator_forward.1} parent=1 // pred_fallthru
      _
    // Predicated region
    $region6: #{generator_forward.1} parent=1 // pred_check
      _
    $region7: #{generator_forward.1} parent=1 // pred_check_branch
      %20 = sbr.rel (0) target = $region9
    $region8: #{generator_forward.1} parent=1 // pred_region
      _
    $region9: #{generator_forward.1} parent=1 // pred_fallthru
      _
    // Predicated region
    $region10: #{generator_forward.1} parent=1 // pred_check
      _
    $region11: #{generator_forward.1} parent=1 // pred_check_branch
      %22 = sbr.rel (0) target = $region13
    $region12: #{generator_forward.1} parent=1 // pred_region
      _
    $region13: #{generator_forward.1} parent=1 // pred_fallthru
      _
    // Predicated region
    $region14: #{generator_forward.1} parent=1 // pred_check
      _
    $region15: #{generator_forward.1} parent=1 // pred_check_branch
      %24 = sbr.rel (0) target = $region17
    $region16: #{generator_forward.1} parent=1 // pred_region
      _
    $region17: #{generator_forward.1} parent=1 // pred_fallthru
      _
    // Predicated region
    $region18: #{generator_forward.1} parent=1 // pred_check
      _
    $region19: #{generator_forward.1} parent=1 // pred_check_branch
      %26 = sbr.rel (0) target = $region21
    $region20: #{generator_forward.1} parent=1 // pred_region
      %s28 = ssub.s32 2048, 2048
      %29 = vsyncadd [#allocation3], %s28
      %s30 = sshll.u32 [#allocation2], 4
      %s31 = int_to_ptr.vmem [resolvable:$true] %s30
      %36 = dma.hbm_to_vmem [thread:$0]  %s4, 2048, %s31, [#allocation3], 128, 128, 8
    $region21: #{generator_forward.1} parent=1 // pred_fallthru
      _
    // Predicated region
    $region22: #{generator_forward.1} parent=1 // pred_check
      _
    $region23: #{generator_forward.1} parent=1 // pred_check_branch
      %38 = sbr.rel (0) target = $region25
    $region24: #{generator_forward.1} parent=1 // pred_region
      _
    $region25: #{generator_forward.1} parent=1 // pred_fallthru
      _
    // Predicated region
    $region26: #{generator_forward.1} parent=1 // pred_check
      _
    $region27: #{generator_forward.1} parent=1 // pred_check_branch
      %40 = sbr.rel (0) target = $region29
    $region28: #{generator_forward.1} parent=1 // pred_region
      %s42 = ssub.s32 2048, 2048
      %43 = vsyncadd [#allocation5], %s42
      %s44 = sshll.u32 [#allocation4], 4
      %s45 = int_to_ptr.vmem [resolvable:$true] %s44
      %50 = dma.hbm_to_vmem [thread:$0]  %s6, 2048, %s45, [#allocation5], 128, 128, 8
    $region29: #{generator_forward.1} parent=1 // pred_fallthru
      _
    // Predicated region
    $region30: #{generator_forward.1} parent=1 // pred_check
      _
    $region31: #{generator_forward.1} parent=1 // pred_check_branch
      %52 = sbr.rel (0) target = $region33
    $region32: #{generator_forward.1} parent=1 // pred_region
      _
    $region33: #{generator_forward.1} parent=1 // pred_fallthru
      _
    // Predicated region
    $region34: #{generator_forward.1} parent=1 // pred_check
      _
    $region35: #{generator_forward.1} parent=1 // pred_check_branch
      %54 = sbr.rel (0) target = $region37
    $region36: #{generator_forward.1} parent=1 // pred_region
      %s56 = ssub.s32 2048, 2048
      %57 = vsyncadd [#allocation5], %s56
      %s58 = sshll.u32 [#allocation6], 4
      %s59 = int_to_ptr.vmem [resolvable:$true] %s58
      %64 = dma.hbm_to_vmem [thread:$0]  %s8, 2048, %s59, [#allocation5], 128, 128, 8
    $region37: #{generator_forward.1} parent=1 // pred_fallthru
      _
    // Predicated region
    $region38: #{generator_forward.1} parent=1 // pred_check
      _
    $region39: #{generator_forward.1} parent=1 // pred_check_branch
      %66 = sbr.rel (0) target = $region41
    $region40: #{generator_forward.1} parent=1 // pred_region
      _
    $region41: #{generator_forward.1} parent=1 // pred_fallthru
      _
    // Predicated region
    $region42: #{generator_forward.1} parent=1 // pred_check
      _
    $region43: #{generator_forward.1} parent=1 // pred_check_branch
      %68 = sbr.rel (0) target = $region45
    $region44: #{generator_forward.1} parent=1 // pred_region
      %69 = dma.done [#allocation3], 2048
    $region45: #{generator_forward.1} parent=1 // pred_fallthru
      _
    // Predicated region
    $region46: #{generator_forward.1} parent=1 // pred_check
      _
    $region47: #{generator_forward.1} parent=1 // pred_check_branch
      %71 = sbr.rel (0) target = $region49
    $region48: #{generator_forward.1} parent=1 // pred_region
      %72 = dma.done [#allocation5], 2048
    $region49: #{generator_forward.1} parent=1 // pred_fallthru
      _
    // Predicated region
    $region50: #{generator_forward.1} parent=1 // pred_check
      _
    $region51: #{generator_forward.1} parent=1 // pred_check_branch
      %74 = sbr.rel (0) target = $region53
    $region52: #{generator_forward.1} parent=1 // pred_region
      %75 = dma.done [#allocation5], 2048
    $region53: #{generator_forward.1} parent=1 // pred_fallthru
      _
    %v76 = vld [vmem:[%s0] sm:$0xff]
    %v77 = vld [vmem:[%s1] sm:$0xff]
    %v78 = vlaneseq
    %v79 = vand.u32 %v78, 127
    %80 = vset.pattern.permute.xlu0 0
    %81 = vperm.xlu0 %80, %v77
    %v82 = vpop.permute.xlu0 %81
    %vm83 = vcmp.eq.s32.totalorder %v79, %v82
    %v84 = vsel %vm83, 1, 0
    %v85 = vcvt.s32.f32 %v84
    %v86 = vld [vmem:[%s2] sm:$0xff]
    %v87 = vld [vmem:[%s3] sm:$0xf]
    %vm88 = vcmask 31744
    %v90 = vsel %vm88, %v85, 0
    %vm92 = vcmask 1043456
    %v94 = vsel %vm92, %v87, 0
    %96 = vmatprep.subr.mxu0 0.0
    %97 = vmatpush1.msra.mxu0 %v94
    %98 = vmatprep.subr.mxu0 0.0
    %99 = vmatpush1.msra.mxu0 0.0
    %100 = vmatprep.subr.mxu0 0.0
    %101 = vmatpush1.msra.mxu0 0.0
    %102 = vmatprep.subr.mxu0 0.0
    %103 = vmatpush1.msra.mxu0 0.0
    %104 = vmatprep.subr.mxu0 0.0
    %105 = vmatpush1.msra.mxu0 0.0
    %106 = vmatprep.subr.mxu0 0.0
    %107 = vmatpush1.msra.mxu0 0.0
    %108 = vmatprep.subr.mxu0 0.0
    %109 = vmatpush1.msra.mxu0 0.0
    %110 = vmatprep.subr.mxu0 0.0
    %111 = vmatpush1.msra.mxu0 0.0
    %112 = vmatprep.subr.mxu0 0.0
    %113 = vmatpush1.msra.mxu0 0.0
    %114 = vmatprep.subr.mxu0 0.0
    %115 = vmatpush1.msra.mxu0 0.0
    %116 = vmatprep.subr.mxu0 0.0
    %117 = vmatpush1.msra.mxu0 0.0
    %118 = vmatprep.subr.mxu0 0.0
    %119 = vmatpush1.msra.mxu0 0.0
    %120 = vmatprep.subr.mxu0 0.0
    %121 = vmatpush1.msra.mxu0 0.0
    %122 = vmatprep.subr.mxu0 0.0
    %123 = vmatpush1.msra.mxu0 0.0
    %124 = vmatprep.subr.mxu0 0.0
    %125 = vmatpush1.msra.mxu0 0.0
    %126 = vmatprep.subr.mxu0 0.0
    %127 = vmatpush1.msra.mxu0 0.0
    %128 = vmatprep.subr.mxu0 0.0
    %129 = vmatpush1.msra.mxu0 0.0
    %130 = vmatprep.subr.mxu0 0.0
    %131 = vmatpush1.msra.mxu0 0.0
    %132 = vmatprep.subr.mxu0 0.0
    %133 = vmatpush1.msra.mxu0 0.0
    %134 = vmatprep.subr.mxu0 0.0
    %135 = vmatpush1.msra.mxu0 0.0
    %136 = vmatprep.subr.mxu0 0.0
    %137 = vmatpush1.msra.mxu0 0.0
    %138 = vmatprep.subr.mxu0 0.0
    %139 = vmatpush1.msra.mxu0 0.0
    %140 = vmatprep.subr.mxu0 0.0
    %141 = vmatpush1.msra.mxu0 0.0
    %142 = vmatprep.subr.mxu0 0.0
    %143 = vmatpush1.msra.mxu0 0.0
    %144 = vmatprep.subr.mxu0 0.0
    %145 = vmatpush1.msra.mxu0 0.0
    %146 = vmatprep.subr.mxu0 0.0
    %147 = vmatpush1.msra.mxu0 0.0
    %148 = vmatprep.subr.mxu0 0.0
    %149 = vmatpush1.msra.mxu0 0.0
    %150 = vmatprep.subr.mxu0 0.0
    %151 = vmatpush1.msra.mxu0 0.0
    %152 = vmatprep.subr.mxu0 0.0
    %153 = vmatpush1.msra.mxu0 0.0
    %154 = vmatprep.subr.mxu0 0.0
    %155 = vmatpush1.msra.mxu0 0.0
    %156 = vmatprep.subr.mxu0 0.0
    %157 = vmatpush1.msra.mxu0 0.0
    %158 = vmatprep.subr.mxu0 0.0
    %159 = vmatpush1.msra.mxu0 0.0
    %160 = vmatprep.mubr.f32.mxu0 0.0
    %161 = vmatmul.mubr.f32.gmra.mrb[0].mxu0 %v90
    %v162 = vpop.f32.mrb[0].mxu0
    %v163 = vadd.f32 0.0, %v162
    %v164 = vpop.f32.mrb[0].mxu0
    %165 = vdwg.mxu0
    %vm166 = vcmask 64512
    %v168 = vsel %vm166, %v76, 0
    %170 = vmatprep.subr.mxu0 0.0
    %171 = vmatpush1.msra.mxu0 %v86
    %172 = vmatprep.subr.mxu0 0.0
    %173 = vmatpush1.msra.mxu0 0.0
    %174 = vmatprep.subr.mxu0 0.0
    %175 = vmatpush1.msra.mxu0 0.0
    %176 = vmatprep.subr.mxu0 0.0
    %177 = vmatpush1.msra.mxu0 0.0
    %178 = vmatprep.subr.mxu0 0.0
    %179 = vmatpush1.msra.mxu0 0.0
    %180 = vmatprep.subr.mxu0 0.0
    %181 = vmatpush1.msra.mxu0 0.0
    %182 = vmatprep.subr.mxu0 0.0
    %183 = vmatpush1.msra.mxu0 0.0
    %184 = vmatprep.subr.mxu0 0.0
    %185 = vmatpush1.msra.mxu0 0.0
    %186 = vmatprep.subr.mxu0 0.0
    %187 = vmatpush1.msra.mxu0 0.0
    %188 = vmatprep.subr.mxu0 0.0
    %189 = vmatpush1.msra.mxu0 0.0
    %190 = vmatprep.subr.mxu0 0.0
    %191 = vmatpush1.msra.mxu0 0.0
    %192 = vmatprep.subr.mxu0 0.0
    %193 = vmatpush1.msra.mxu0 0.0
    %194 = vmatprep.subr.mxu0 0.0
    %195 = vmatpush1.msra.mxu0 0.0
    %196 = vmatprep.subr.mxu0 0.0
    %197 = vmatpush1.msra.mxu0 0.0
    %198 = vmatprep.subr.mxu0 0.0
    %199 = vmatpush1.msra.mxu0 0.0
    %200 = vmatprep.subr.mxu0 0.0
    %201 = vmatpush1.msra.mxu0 0.0
    %202 = vmatprep.subr.mxu0 0.0
    %203 = vmatpush1.msra.mxu0 0.0
    %204 = vmatprep.subr.mxu0 0.0
    %205 = vmatpush1.msra.mxu0 0.0
    %206 = vmatprep.subr.mxu0 0.0
    %207 = vmatpush1.msra.mxu0 0.0
    %208 = vmatprep.subr.mxu0 0.0
    %209 = vmatpush1.msra.mxu0 0.0
    %210 = vmatprep.subr.mxu0 0.0
    %211 = vmatpush1.msra.mxu0 0.0
    %212 = vmatprep.subr.mxu0 0.0
    %213 = vmatpush1.msra.mxu0 0.0
    %214 = vmatprep.subr.mxu0 0.0
    %215 = vmatpush1.msra.mxu0 0.0
    %216 = vmatprep.subr.mxu0 0.0
    %217 = vmatpush1.msra.mxu0 0.0
    %218 = vmatprep.subr.mxu0 0.0
    %219 = vmatpush1.msra.mxu0 0.0
    %220 = vmatprep.subr.mxu0 0.0
    %221 = vmatpush1.msra.mxu0 0.0
    %222 = vmatprep.subr.mxu0 0.0
    %223 = vmatpush1.msra.mxu0 0.0
    %224 = vmatprep.subr.mxu0 0.0
    %225 = vmatpush1.msra.mxu0 0.0
    %226 = vmatprep.subr.mxu0 0.0
    %227 = vmatpush1.msra.mxu0 0.0
    %228 = vmatprep.subr.mxu0 0.0
    %229 = vmatpush1.msra.mxu0 0.0
    %230 = vmatprep.subr.mxu0 0.0
    %231 = vmatpush1.msra.mxu0 0.0
    %232 = vmatprep.subr.mxu0 0.0
    %233 = vmatpush1.msra.mxu0 0.0
    %234 = vmatprep.mubr.f32.mxu0 0.0
    %235 = vmatmul.mubr.f32.gmra.mrb[0].mxu0 %v168
    %v236 = vpop.f32.mrb[0].mxu0
    %v237 = vadd.f32 %v163, %v236
    %v238 = vpop.f32.mrb[0].mxu0
    %239 = vdwg.mxu0
    %vm240 = vcmp.gt.f32.partialorder %v237, 0.0
    %v241 = vmul.f32 %v237, 0.2
    %v242 = vsel %vm240, %v237, %v241
    %v243 = vld [vmem:[#allocation2] sm:$0xff]
    %v244 = vld [vmem:[#allocation2 + $0x8] sm:$0xff]
    %v245 = vld [vmem:[#allocation2 + $0x10] sm:$0xff]
    %v246 = vld [vmem:[#allocation2 + $0x18] sm:$0xff]
    %v247 = vld [vmem:[#allocation2 + $0x20] sm:$0xff]
    %v248 = vld [vmem:[#allocation2 + $0x28] sm:$0xff]
    %v249 = vld [vmem:[#allocation2 + $0x30] sm:$0xff]
    %v250 = vld [vmem:[#allocation2 + $0x38] sm:$0xff]
    %v251 = vld [vmem:[#allocation2 + $0x40] sm:$0xff]
    %v252 = vld [vmem:[#allocation2 + $0x48] sm:$0xff]
    %v253 = vld [vmem:[#allocation2 + $0x50] sm:$0xff]
    %v254 = vld [vmem:[#allocation2 + $0x58] sm:$0xff]
    %v255 = vld [vmem:[#allocation2 + $0x60] sm:$0xff]
    %v256 = vld [vmem:[#allocation2 + $0x68] sm:$0xff]
    %v257 = vld [vmem:[#allocation2 + $0x70] sm:$0xff]
    %v258 = vld [vmem:[#allocation2 + $0x78] sm:$0xff]
    %v259 = vld [vmem:[%s5] sm:$0x1]
    %v261 = vlaneseq
    %v262 = vshrl.u32 %v261, 7
    %v263 = vsub.s32 0, %v262
    %v264 = vrot.slane %v259, %v263
    %266 = vmatprep.subr.mxu0 0.0
    %267 = vmatpush1.msra.mxu0 %v243
    %268 = vmatprep.subr.mxu0 0.0
    %269 = vmatpush1.msra.mxu0 %v244
    %270 = vmatprep.subr.mxu0 0.0
    %271 = vmatpush1.msra.mxu0 %v245
    %272 = vmatprep.subr.mxu0 0.0
    %273 = vmatpush1.msra.mxu0 %v246
    %274 = vmatprep.subr.mxu0 0.0
    %275 = vmatpush1.msra.mxu0 %v247
    %276 = vmatprep.subr.mxu0 0.0
    %277 = vmatpush1.msra.mxu0 %v248
    %278 = vmatprep.subr.mxu0 0.0
    %279 = vmatpush1.msra.mxu0 %v249
    %280 = vmatprep.subr.mxu0 0.0
    %281 = vmatpush1.msra.mxu0 %v250
    %282 = vmatprep.subr.mxu0 0.0
    %283 = vmatpush1.msra.mxu0 %v251
    %284 = vmatprep.subr.mxu0 0.0
    %285 = vmatpush1.msra.mxu0 %v252
    %286 = vmatprep.subr.mxu0 0.0
    %287 = vmatpush1.msra.mxu0 %v253
    %288 = vmatprep.subr.mxu0 0.0
    %289 = vmatpush1.msra.mxu0 %v254
    %290 = vmatprep.subr.mxu0 0.0
    %291 = vmatpush1.msra.mxu0 %v255
    %292 = vmatprep.subr.mxu0 0.0
    %293 = vmatpush1.msra.mxu0 %v256
    %294 = vmatprep.subr.mxu0 0.0
    %295 = vmatpush1.msra.mxu0 %v257
    %296 = vmatprep.subr.mxu0 0.0
    %297 = vmatpush1.msra.mxu0 %v258
    %298 = vmatprep.subr.mxu0 0.0
    %299 = vmatpush1.msra.mxu0 0.0
    %300 = vmatprep.subr.mxu0 0.0
    %301 = vmatpush1.msra.mxu0 0.0
    %302 = vmatprep.subr.mxu0 0.0
    %303 = vmatpush1.msra.mxu0 0.0
    %304 = vmatprep.subr.mxu0 0.0
    %305 = vmatpush1.msra.mxu0 0.0
    %306 = vmatprep.subr.mxu0 0.0
    %307 = vmatpush1.msra.mxu0 0.0
    %308 = vmatprep.subr.mxu0 0.0
    %309 = vmatpush1.msra.mxu0 0.0
    %310 = vmatprep.subr.mxu0 0.0
    %311 = vmatpush1.msra.mxu0 0.0
    %312 = vmatprep.subr.mxu0 0.0
    %313 = vmatpush1.msra.mxu0 0.0
    %314 = vmatprep.subr.mxu0 0.0
    %315 = vmatpush1.msra.mxu0 0.0
    %316 = vmatprep.subr.mxu0 0.0
    %317 = vmatpush1.msra.mxu0 0.0
    %318 = vmatprep.subr.mxu0 0.0
    %319 = vmatpush1.msra.mxu0 0.0
    %320 = vmatprep.subr.mxu0 0.0
    %321 = vmatpush1.msra.mxu0 0.0
    %322 = vmatprep.subr.mxu0 0.0
    %323 = vmatpush1.msra.mxu0 0.0
    %324 = vmatprep.subr.mxu0 0.0
    %325 = vmatpush1.msra.mxu0 0.0
    %326 = vmatprep.subr.mxu0 0.0
    %327 = vmatpush1.msra.mxu0 0.0
    %328 = vmatprep.subr.mxu0 0.0
    %329 = vmatpush1.msra.mxu0 0.0
    %330 = vmatprep.mubr.f32.mxu0 0.0
    %331 = vmatmul.mubr.f32.gmra.mrb[0].mxu0 %v242
    %v332 = vpop.f32.mrb[0].mxu0
    %v333 = vadd.f32 %v264, %v332
    %v334 = vpop.f32.mrb[0].mxu0
    %335 = vdwg.mxu0
    %vm336 = vcmp.gt.f32.partialorder %v333, 0.0
    %v337 = vmul.f32 %v333, 0.2
    %v338 = vsel %vm336, %v333, %v337
    %v339 = vld [vmem:[#allocation4] sm:$0xff]
    %v340 = vld [vmem:[#allocation4 + $0x8] sm:$0xff]
    %v341 = vld [vmem:[#allocation4 + $0x10] sm:$0xff]
    %v342 = vld [vmem:[#allocation4 + $0x18] sm:$0xff]
    %v343 = vld [vmem:[#allocation4 + $0x20] sm:$0xff]
    %v344 = vld [vmem:[#allocation4 + $0x28] sm:$0xff]
    %v345 = vld [vmem:[#allocation4 + $0x30] sm:$0xff]
    %v346 = vld [vmem:[#allocation4 + $0x38] sm:$0xff]
    %v347 = vld [vmem:[#allocation4 + $0x40] sm:$0xff]
    %v348 = vld [vmem:[#allocation4 + $0x48] sm:$0xff]
    %v349 = vld [vmem:[#allocation4 + $0x50] sm:$0xff]
    %v350 = vld [vmem:[#allocation4 + $0x58] sm:$0xff]
    %v351 = vld [vmem:[#allocation4 + $0x60] sm:$0xff]
    %v352 = vld [vmem:[#allocation4 + $0x68] sm:$0xff]
    %v353 = vld [vmem:[#allocation4 + $0x70] sm:$0xff]
    %v354 = vld [vmem:[#allocation4 + $0x78] sm:$0xff]
    %v355 = vld [vmem:[%s7] sm:$0x1]
    %v357 = vlaneseq
    %v358 = vshrl.u32 %v357, 7
    %v359 = vsub.s32 0, %v358
    %v360 = vrot.slane %v355, %v359
    %362 = vmatprep.subr.mxu0 0.0
    %363 = vmatpush1.msra.mxu0 %v339
    %364 = vmatprep.subr.mxu0 0.0
    %365 = vmatpush1.msra.mxu0 %v340
    %366 = vmatprep.subr.mxu0 0.0
    %367 = vmatpush1.msra.mxu0 %v341
    %368 = vmatprep.subr.mxu0 0.0
    %369 = vmatpush1.msra.mxu0 %v342
    %370 = vmatprep.subr.mxu0 0.0
    %371 = vmatpush1.msra.mxu0 %v343
    %372 = vmatprep.subr.mxu0 0.0
    %373 = vmatpush1.msra.mxu0 %v344
    %374 = vmatprep.subr.mxu0 0.0
    %375 = vmatpush1.msra.mxu0 %v345
    %376 = vmatprep.subr.mxu0 0.0
    %377 = vmatpush1.msra.mxu0 %v346
    %378 = vmatprep.subr.mxu0 0.0
    %379 = vmatpush1.msra.mxu0 %v347
    %380 = vmatprep.subr.mxu0 0.0
    %381 = vmatpush1.msra.mxu0 %v348
    %382 = vmatprep.subr.mxu0 0.0
    %383 = vmatpush1.msra.mxu0 %v349
    %384 = vmatprep.subr.mxu0 0.0
    %385 = vmatpush1.msra.mxu0 %v350
    %386 = vmatprep.subr.mxu0 0.0
    %387 = vmatpush1.msra.mxu0 %v351
    %388 = vmatprep.subr.mxu0 0.0
    %389 = vmatpush1.msra.mxu0 %v352
    %390 = vmatprep.subr.mxu0 0.0
    %391 = vmatpush1.msra.mxu0 %v353
    %392 = vmatprep.subr.mxu0 0.0
    %393 = vmatpush1.msra.mxu0 %v354
    %394 = vmatprep.subr.mxu0 0.0
    %395 = vmatpush1.msra.mxu0 0.0
    %396 = vmatprep.subr.mxu0 0.0
    %397 = vmatpush1.msra.mxu0 0.0
    %398 = vmatprep.subr.mxu0 0.0
    %399 = vmatpush1.msra.mxu0 0.0
    %400 = vmatprep.subr.mxu0 0.0
    %401 = vmatpush1.msra.mxu0 0.0
    %402 = vmatprep.subr.mxu0 0.0
    %403 = vmatpush1.msra.mxu0 0.0
    %404 = vmatprep.subr.mxu0 0.0
    %405 = vmatpush1.msra.mxu0 0.0
    %406 = vmatprep.subr.mxu0 0.0
    %407 = vmatpush1.msra.mxu0 0.0
    %408 = vmatprep.subr.mxu0 0.0
    %409 = vmatpush1.msra.mxu0 0.0
    %410 = vmatprep.subr.mxu0 0.0
    %411 = vmatpush1.msra.mxu0 0.0
    %412 = vmatprep.subr.mxu0 0.0
    %413 = vmatpush1.msra.mxu0 0.0
    %414 = vmatprep.subr.mxu0 0.0
    %415 = vmatpush1.msra.mxu0 0.0
    %416 = vmatprep.subr.mxu0 0.0
    %417 = vmatpush1.msra.mxu0 0.0
    %418 = vmatprep.subr.mxu0 0.0
    %419 = vmatpush1.msra.mxu0 0.0
    %420 = vmatprep.subr.mxu0 0.0
    %421 = vmatpush1.msra.mxu0 0.0
    %422 = vmatprep.subr.mxu0 0.0
    %423 = vmatpush1.msra.mxu0 0.0
    %424 = vmatprep.subr.mxu0 0.0
    %425 = vmatpush1.msra.mxu0 0.0
    %426 = vmatprep.mubr.f32.mxu0 0.0
    %427 = vmatmul.mubr.f32.gmra.mrb[0].mxu0 %v338
    %v428 = vpop.f32.mrb[0].mxu0
    %v429 = vadd.f32 %v360, %v428
    %v430 = vpop.f32.mrb[0].mxu0
    %431 = vdwg.mxu0
    %vm432 = vcmp.gt.f32.partialorder %v429, 0.0
    %v433 = vmul.f32 %v429, 0.2
    %v434 = vsel %vm432, %v429, %v433
    %v435 = vld [vmem:[#allocation6] sm:$0xff]
    %v436 = vld [vmem:[#allocation6 + $0x8] sm:$0xff]
    %v437 = vld [vmem:[#allocation6 + $0x10] sm:$0xff]
    %v438 = vld [vmem:[#allocation6 + $0x18] sm:$0xff]
    %v439 = vld [vmem:[#allocation6 + $0x20] sm:$0xff]
    %v440 = vld [vmem:[#allocation6 + $0x28] sm:$0xff]
    %v441 = vld [vmem:[#allocation6 + $0x30] sm:$0xff]
    %v442 = vld [vmem:[#allocation6 + $0x38] sm:$0xff]
    %v443 = vld [vmem:[#allocation6 + $0x40] sm:$0xff]
    %v444 = vld [vmem:[#allocation6 + $0x48] sm:$0xff]
    %v445 = vld [vmem:[#allocation6 + $0x50] sm:$0xff]
    %v446 = vld [vmem:[#allocation6 + $0x58] sm:$0xff]
    %v447 = vld [vmem:[#allocation6 + $0x60] sm:$0xff]
    %v448 = vld [vmem:[#allocation6 + $0x68] sm:$0xff]
    %v449 = vld [vmem:[#allocation6 + $0x70] sm:$0xff]
    %v450 = vld [vmem:[#allocation6 + $0x78] sm:$0xff]
    %v451 = vld [vmem:[%s9] sm:$0x1]
    %v453 = vlaneseq
    %v454 = vshrl.u32 %v453, 7
    %v455 = vsub.s32 0, %v454
    %v456 = vrot.slane %v451, %v455
    %458 = vmatprep.subr.mxu0 0.0
    %459 = vmatpush1.msra.mxu0 %v435
    %460 = vmatprep.subr.mxu0 0.0
    %461 = vmatpush1.msra.mxu0 %v436
    %462 = vmatprep.subr.mxu0 0.0
    %463 = vmatpush1.msra.mxu0 %v437
    %464 = vmatprep.subr.mxu0 0.0
    %465 = vmatpush1.msra.mxu0 %v438
    %466 = vmatprep.subr.mxu0 0.0
    %467 = vmatpush1.msra.mxu0 %v439
    %468 = vmatprep.subr.mxu0 0.0
    %469 = vmatpush1.msra.mxu0 %v440
    %470 = vmatprep.subr.mxu0 0.0
    %471 = vmatpush1.msra.mxu0 %v441
    %472 = vmatprep.subr.mxu0 0.0
    %473 = vmatpush1.msra.mxu0 %v442
    %474 = vmatprep.subr.mxu0 0.0
    %475 = vmatpush1.msra.mxu0 %v443
    %476 = vmatprep.subr.mxu0 0.0
    %477 = vmatpush1.msra.mxu0 %v444
    %478 = vmatprep.subr.mxu0 0.0
    %479 = vmatpush1.msra.mxu0 %v445
    %480 = vmatprep.subr.mxu0 0.0
    %481 = vmatpush1.msra.mxu0 %v446
    %482 = vmatprep.subr.mxu0 0.0
    %483 = vmatpush1.msra.mxu0 %v447
    %484 = vmatprep.subr.mxu0 0.0
    %485 = vmatpush1.msra.mxu0 %v448
    %486 = vmatprep.subr.mxu0 0.0
    %487 = vmatpush1.msra.mxu0 %v449
    %488 = vmatprep.subr.mxu0 0.0
    %489 = vmatpush1.msra.mxu0 %v450
    %490 = vmatprep.subr.mxu0 0.0
    %491 = vmatpush1.msra.mxu0 0.0
    %492 = vmatprep.subr.mxu0 0.0
    %493 = vmatpush1.msra.mxu0 0.0
    %494 = vmatprep.subr.mxu0 0.0
    %495 = vmatpush1.msra.mxu0 0.0
    %496 = vmatprep.subr.mxu0 0.0
    %497 = vmatpush1.msra.mxu0 0.0
    %498 = vmatprep.subr.mxu0 0.0
    %499 = vmatpush1.msra.mxu0 0.0
    %500 = vmatprep.subr.mxu0 0.0
    %501 = vmatpush1.msra.mxu0 0.0
    %502 = vmatprep.subr.mxu0 0.0
    %503 = vmatpush1.msra.mxu0 0.0
    %504 = vmatprep.subr.mxu0 0.0
    %505 = vmatpush1.msra.mxu0 0.0
    %506 = vmatprep.subr.mxu0 0.0
    %507 = vmatpush1.msra.mxu0 0.0
    %508 = vmatprep.subr.mxu0 0.0
    %509 = vmatpush1.msra.mxu0 0.0
    %510 = vmatprep.subr.mxu0 0.0
    %511 = vmatpush1.msra.mxu0 0.0
    %512 = vmatprep.subr.mxu0 0.0
    %513 = vmatpush1.msra.mxu0 0.0
    %514 = vmatprep.subr.mxu0 0.0
    %515 = vmatpush1.msra.mxu0 0.0
    %516 = vmatprep.subr.mxu0 0.0
    %517 = vmatpush1.msra.mxu0 0.0
    %518 = vmatprep.subr.mxu0 0.0
    %519 = vmatpush1.msra.mxu0 0.0
    %520 = vmatprep.subr.mxu0 0.0
    %521 = vmatpush1.msra.mxu0 0.0
    %522 = vmatprep.mubr.f32.mxu0 0.0
    %523 = vmatmul.mubr.f32.gmra.mrb[0].mxu0 %v434
    %v524 = vpop.f32.mrb[0].mxu0
    %v525 = vadd.f32 %v456, %v524
    %v526 = vpop.f32.mrb[0].mxu0
    %527 = vdwg.mxu0
    %v528 = vtanh.pop %v525
    %529 = vxpose.xlu0.b32.start [1/16] %v528, 128
    %530 = vxpose.xlu0.b32.cont [2/16] 0.0, 128
    %531 = vxpose.xlu0.b32.cont [3/16] 0.0, 128
    %532 = vxpose.xlu0.b32.cont [4/16] 0.0, 128
    %533 = vxpose.xlu0.b32.cont [5/16] 0.0, 128
    %534 = vxpose.xlu0.b32.cont [6/16] 0.0, 128
    %535 = vxpose.xlu0.b32.cont [7/16] 0.0, 128
    %536 = vxpose.xlu0.b32.cont [8/16] 0.0, 128
    %537 = vxpose.xlu0.b32.cont [9/16] 0.0, 128
    %538 = vxpose.xlu0.b32.cont [10/16] 0.0, 128
    %539 = vxpose.xlu0.b32.cont [11/16] 0.0, 128
    %540 = vxpose.xlu0.b32.cont [12/16] 0.0, 128
    %541 = vxpose.xlu0.b32.cont [13/16] 0.0, 128
    %542 = vxpose.xlu0.b32.cont [14/16] 0.0, 128
    %543 = vxpose.xlu0.b32.cont [15/16] 0.0, 128
    %544 = vxpose.xlu0.b32.end [16/16] 0.0, 128
    %v545 = vpop.trf.xlu0
    %v546 = vpop.trf.xlu0
    %v547 = vpop.trf.xlu0
    %v548 = vpop.trf.xlu0
    %v549 = vpop.trf.xlu0
    %v550 = vpop.trf.xlu0
    %v551 = vpop.trf.xlu0
    %v552 = vpop.trf.xlu0
    %v553 = vpop.trf.xlu0
    %v554 = vpop.trf.xlu0
    %v555 = vpop.trf.xlu0
    %v556 = vpop.trf.xlu0
    %v557 = vpop.trf.xlu0
    %v558 = vpop.trf.xlu0
    %v559 = vpop.trf.xlu0
    %v560 = vpop.trf.xlu0
    %561 = vst.msk [vmem:[%s10] sm:$0xff] %vm166, %v545
    %562 = vst.msk [vmem:[%s10 + $0x8] sm:$0xff] %vm166, %v546
    %563 = vst.msk [vmem:[%s10 + $0x10] sm:$0xff] %vm166, %v547
    // Predicated region
    $region54: #{generator_forward.1} parent=1 // pred_check
      _
    $region55: #{generator_forward.1} parent=1 // pred_check_branch
      %565 = sbr.rel (0) target = $region57
    $region56: #{generator_forward.1} parent=1 // pred_region
      _
    $region57: #{generator_forward.1} parent=1 // pred_fallthru
      _
    // Predicated region
    $region58: #{generator_forward.1} parent=1 // pred_check
      _
    $region59: #{generator_forward.1} parent=1 // pred_check_branch
      %567 = sbr.rel (0) target = $region61
    $region60: #{generator_forward.1} parent=1 // pred_region
      _
    $region61: #{generator_forward.1} parent=1 // pred_fallthru
      _
    %568 = vsyncpa [#allocation3], 1
    %569 = vsyncpa [#allocation5], 1

</llo_original>
